<compile_context>
chip_gen: v7x
topology: tpu7x:2x2x1
jax: 0.10.0
libtpu: 0.0.40
codegen_flags: <defaults>
</compile_context>

<pallas_src>
import jax
import jax.numpy as jnp
from jax.experimental import pallas as pl
from jax.experimental.pallas import tpu as pltpu


def _round_up(x, m):
    return (x + m - 1) // m * m


def head_kernel(x_ref, w1_ref, b1_ref, w2_ref, b2_ref, o_ref):
    # x_ref: (tm, H) compute dtype; w1_ref: (H, H); w2_ref: (H, Lp);
    # b1_ref: (1, H) f32; b2_ref: (1, Lp) f32; o_ref: (tm, Lp) output dtype.
    # MXU with native-dtype operands, f32 accumulation.
    h = jnp.dot(x_ref[...], w1_ref[...], preferred_element_type=jnp.float32)
    # Bias add + tanh in f32 (EUP slot; kept f32 so it is valid on v5e as well).
    h = jnp.tanh(h + b1_ref[...])
    # Back to the weight dtype for the second matmul (no-op for f32 deployments).
    p = h.astype(w2_ref.dtype)
    y = jnp.dot(p, w2_ref[...], preferred_element_type=jnp.float32)
    y = y + b2_ref[...]
    o_ref[...] = y.astype(o_ref.dtype)


def model_head(features, w1, b1, w2, b2, *, tm=1024, compute_dtype=jnp.bfloat16):
    """features: (B, S, H) -> logits: (B, S, L). Dropout is identity (eval mode)."""
    B, S, H = features.shape
    assert w1.shape == (H, H)
    L = w2.shape[1]
    out_dtype = features.dtype

    x = features.reshape(B * S, H)
    M = x.shape[0]

    # Feed the MXU bf16 (full-rate MXU, half the DMA bytes); f32 accumulate in-kernel.
    x = x.astype(compute_dtype)
    w1 = w1.astype(compute_dtype)
    w2 = w2.astype(compute_dtype)
    b1 = b1.reshape(1, H).astype(jnp.float32)
    b2 = b2.reshape(1, L).astype(jnp.float32)

    # Lane-dense output: pad num_labels up to a multiple of 128 (unmasked stores).
    Lp = _round_up(L, 128)
    if Lp != L:
        w2 = jnp.pad(w2, ((0, 0), (0, Lp - L)))
        b2 = jnp.pad(b2, ((0, 0), (0, Lp - L)))

    # Row tile: multiple of 8, no larger than the row count. NO padding of x —
    # the grid is pl.cdiv(M, tm); Pallas masks the ragged final block.
    tm = max(8, _round_up(min(int(tm), _round_up(M, 8)), 8))
    if pl.cdiv(M, tm) < 2 and M > 8:
        # Ensure >=2 grid steps so the "parallel" axis can shard over v7x's 2 TCs.
        tm = max(8, _round_up(pl.cdiv(M, 2), 8))
    grid = (pl.cdiv(M, tm),)

    # VMEM budget: double-buffered x / out tiles + single-buffered resident weights
    # + headroom; capped below the physical VMEM capacity (v7x has only 64 MiB).
    isz_c = jnp.dtype(compute_dtype).itemsize
    isz_o = jnp.dtype(out_dtype).itemsize
    need = (2 * tm * H * isz_c            # x tiles (double-buffered)
            + 2 * tm * Lp * isz_o         # output tiles (double-buffered)
            + (H * H + H * Lp) * isz_c    # W1, W2 (single-buffered, resident)
            + 4 * (H + Lp)                # biases (f32)
            + (4 << 20))                  # headroom for Mosaic scratch
    try:
        vmem_cap = pltpu.get_tpu_info().vmem_capacity_bytes
    except Exception:
        vmem_cap = 64 << 20
    vmem_limit = int(min(max(need, 16 << 20), vmem_cap - (8 << 20)))

    cost = pl.CostEstimate(
        flops=int(2 * M * H * (H + Lp)),
        transcendentals=int(M * H),
        bytes_accessed=int(isz_c * (M * H + H * H + H * Lp)
                           + isz_o * M * Lp
                           + 4 * (H + Lp)),
    )

    resident = dict(pipeline_mode=pl.Buffered(1))   # constant index_map -> 1 buffer

    out = pl.pallas_call(
        head_kernel,
        out_shape=jax.ShapeDtypeStruct((M, Lp), out_dtype),
        grid_spec=pltpu.PrefetchScalarGridSpec(
            num_scalar_prefetch=0,
            grid=grid,
            in_specs=[
                pl.BlockSpec((tm, H), lambda i: (i, 0)),              # x (streamed)
                pl.BlockSpec((H, H), lambda i: (0, 0), **resident),   # dense weight
                pl.BlockSpec((1, H), lambda i: (0, 0), **resident),   # dense bias
                pl.BlockSpec((H, Lp), lambda i: (0, 0), **resident),  # out_proj weight
                pl.BlockSpec((1, Lp), lambda i: (0, 0), **resident),  # out_proj bias
            ],
            out_specs=pl.BlockSpec((tm, Lp), lambda i: (i, 0)),
        ),
        compiler_params=pltpu.CompilerParams(
            dimension_semantics=("parallel",),
            vmem_limit_bytes=vmem_limit,
        ),
        cost_estimate=cost,
    )(x, w1, b1, w2, b2)

    # Slice away only the label padding (tiny copy) and restore (B, S, L).
    if Lp != L:
        out = out[:, :L]
    return out.reshape(B, S, L)


if __name__ == "__main__":
    # Small config consistent with the module: hidden_size=32, num_labels=8.
    B, S, H, L = 2, 8, 32, 8

    key = jax.random.PRNGKey(0)
    kx, kw1, kb1, kw2, kb2 = jax.random.split(key, 5)

    features = jax.random.normal(kx, (B, S, H), dtype=jnp.float32)

    # Deterministic synthetic params (PyTorch Linear-style uniform init bounds),
    # stored pre-transposed as (in_features, out_features).
    bound = 1.0 / jnp.sqrt(H)
    w1 = jax.random.uniform(kw1, (H, H), jnp.float32, -bound, bound)
    b1 = jax.random.uniform(kb1, (H,), jnp.float32, -bound, bound)
    w2 = jax.random.uniform(kw2, (H, L), jnp.float32, -bound, bound)
    b2 = jax.random.uniform(kb2, (L,), jnp.float32, -bound, bound)

    # NOTE: both dropout layers are inference no-ops (identity).
    out = model_head(features, w1, b1, w2, b2)
    out = jax.block_until_ready(out)
    assert out.shape == (B, S, L)

    # Reference (a): matched to the kernel precision (bf16 MXU, f32 accumulate).
    x2 = features.reshape(B * S, H)
    cdt = jnp.bfloat16
    h = jnp.dot(x2.astype(cdt), w1.astype(cdt),
                preferred_element_type=jnp.float32) + b1
    h = jnp.tanh(h)
    ref_m = (jnp.dot(h.astype(cdt), w2.astype(cdt),
                     preferred_element_type=jnp.float32) + b2).reshape(B, S, L)
    # Reference (b): full-f32 PyTorch-equivalent forward (loose tol for bf16 MXU).
    ref_f32 = (jnp.tanh(x2 @ w1 + b1) @ w2 + b2).reshape(B, S, L)

    assert jnp.allclose(out, ref_m, atol=1e-3, rtol=1e-3), \
        float(jnp.max(jnp.abs(out - ref_m)))
    assert jnp.allclose(out, ref_f32, atol=5e-2, rtol=5e-2)

    print("KERNEL_OK")
</pallas_src>

<mosaic_0001>
module attributes {stable_mosaic.version = 11 : i64} {
  func.func @head_kernel(%arg0: i32, %arg1: memref<8x32xbf16, #tpu.memory_space<vmem>>, %arg2: memref<32x32xbf16, #tpu.memory_space<vmem>>, %arg3: memref<1x32xf32, #tpu.memory_space<vmem>>, %arg4: memref<32x128xbf16, #tpu.memory_space<vmem>>, %arg5: memref<1x128xf32, #tpu.memory_space<vmem>>, %arg6: memref<8x128xf32, #tpu.memory_space<vmem>>) attributes {dimension_semantics = [#tpu.dimension_semantics<parallel>], iteration_bounds = array<i64: 2>, scalar_prefetch = 0 : i64, scratch_operands = 0 : i64, tpu.core_type = #tpu.core_type<tc>, window_params = [{transform_indices = @transform_0, window_bounds = array<i64: 8, 32>}, {pipeline_mode = #tpu.pipeline_mode<synchronous>, transform_indices = @transform_1, window_bounds = array<i64: 32, 32>}, {pipeline_mode = #tpu.pipeline_mode<synchronous>, transform_indices = @transform_2, window_bounds = array<i64: 1, 32>}, {pipeline_mode = #tpu.pipeline_mode<synchronous>, transform_indices = @transform_3, window_bounds = array<i64: 32, 128>}, {pipeline_mode = #tpu.pipeline_mode<synchronous>, transform_indices = @transform_4, window_bounds = array<i64: 1, 128>}, {transform_indices = @transform_5, window_bounds = array<i64: 8, 128>}]} {
    %c0 = arith.constant 0 : index
    %c0_0 = arith.constant 0 : index
    %0 = vector.load %arg1[%c0, %c0_0] : memref<8x32xbf16, #tpu.memory_space<vmem>>, vector<8x32xbf16>
    %c0_1 = arith.constant 0 : index
    %c0_2 = arith.constant 0 : index
    %1 = vector.load %arg2[%c0_1, %c0_2] : memref<32x32xbf16, #tpu.memory_space<vmem>>, vector<32x32xbf16>
    %cst = arith.constant dense<0.000000e+00> : vector<8x32xf32>
    %2 = tpu.matmul %0, %1, %cst {dimension_numbers = #tpu.dot_dimension_numbers<[1], [0], [0], [1], [0, 0, 1, 1], [], []>} : vector<8x32xbf16>, vector<32x32xbf16>, vector<8x32xf32> -> vector<8x32xf32>
    %c0_3 = arith.constant 0 : index
    %c0_4 = arith.constant 0 : index
    %3 = vector.load %arg3[%c0_3, %c0_4] : memref<1x32xf32, #tpu.memory_space<vmem>>, vector<1x32xf32>
    %4 = vector.broadcast %3 : vector<1x32xf32> to vector<8x32xf32>
    %5 = arith.addf %2, %4 : vector<8x32xf32>
    %6 = math.tanh %5 : vector<8x32xf32>
    %7 = arith.truncf %6 : vector<8x32xf32> to vector<8x32xbf16>
    %c0_5 = arith.constant 0 : index
    %c0_6 = arith.constant 0 : index
    %8 = vector.load %arg4[%c0_5, %c0_6] : memref<32x128xbf16, #tpu.memory_space<vmem>>, vector<32x128xbf16>
    %cst_7 = arith.constant dense<0.000000e+00> : vector<8x128xf32>
    %9 = tpu.matmul %7, %8, %cst_7 {dimension_numbers = #tpu.dot_dimension_numbers<[1], [0], [0], [1], [0, 0, 1, 1], [], []>} : vector<8x32xbf16>, vector<32x128xbf16>, vector<8x128xf32> -> vector<8x128xf32>
    %c0_8 = arith.constant 0 : index
    %c0_9 = arith.constant 0 : index
    %10 = vector.load %arg5[%c0_8, %c0_9] : memref<1x128xf32, #tpu.memory_space<vmem>>, vector<1x128xf32>
    %11 = vector.broadcast %10 : vector<1x128xf32> to vector<8x128xf32>
    %12 = arith.addf %9, %11 : vector<8x128xf32>
    %c0_10 = arith.constant 0 : index
    %c0_11 = arith.constant 0 : index
    %13 = vector.load %arg6[%c0_10, %c0_11] : memref<8x128xf32, #tpu.memory_space<vmem>>, vector<8x128xf32>
    tpu.vector_store %arg6[%c0_10, %c0_11], %12 {strides = array<i32>} : memref<8x128xf32, #tpu.memory_space<vmem>>, vector<8x128xf32>,
    return
  }
  func.func @transform_0(%arg0: i32) -> (i32, i32) {
    %c0_i32 = arith.constant 0 : i32
    %c0_i32_0 = arith.constant 0 : i32
    return %arg0, %c0_i32 : i32, i32
  }
  func.func @transform_1(%arg0: i32) -> (i32, i32) {
    %c0_i32 = arith.constant 0 : i32
    %c0_i32_0 = arith.constant 0 : i32
    %c0_i32_1 = arith.constant 0 : i32
    return %c0_i32, %c0_i32_0 : i32, i32
  }
  func.func @transform_2(%arg0: i32) -> (i32, i32) {
    %c0_i32 = arith.constant 0 : i32
    %c0_i32_0 = arith.constant 0 : i32
    %c0_i32_1 = arith.constant 0 : i32
    return %c0_i32, %c0_i32_0 : i32, i32
  }
  func.func @transform_3(%arg0: i32) -> (i32, i32) {
    %c0_i32 = arith.constant 0 : i32
    %c0_i32_0 = arith.constant 0 : i32
    %c0_i32_1 = arith.constant 0 : i32
    return %c0_i32, %c0_i32_0 : i32, i32
  }
  func.func @transform_4(%arg0: i32) -> (i32, i32) {
    %c0_i32 = arith.constant 0 : i32
    %c0_i32_0 = arith.constant 0 : i32
    %c0_i32_1 = arith.constant 0 : i32
    return %c0_i32, %c0_i32_0 : i32, i32
  }
  func.func @transform_5(%arg0: i32) -> (i32, i32) {
    %c0_i32 = arith.constant 0 : i32
    %c0_i32_0 = arith.constant 0 : i32
    return %arg0, %c0_i32 : i32, i32
  }
}

</mosaic_0001>

<llo_original>
// kernel: tpu_custom_call.1
$region0: #{tpu_custom_call.1}
  #allocation0 [shape = 'u32[]', space=smem, size = 0x4, offset = 0x4, fixed_abs, tag = 'smem constant byte address 0x4 - core index']
  #allocation1 [shape = 'u32[144,128]{1,0:T(1,128)}', space=vmem, size = 0x12000, scoped, tag = 'internal scratch']
  %s0 = inlined_call_operand.hbm [shape: bf16[16,32], index: 0, kind: input, shape index: {}]
  %s1 = inlined_call_operand.hbm [shape: bf16[32,32], index: 1, kind: input, shape index: {}]
  %s2 = inlined_call_operand.vmem [shape: f32[1,32], index: 2, kind: input, shape index: {}]
  %s3 = inlined_call_operand.hbm [shape: bf16[32,128], index: 3, kind: input, shape index: {}]
  %s4 = inlined_call_operand.vmem [shape: f32[1,128], index: 4, kind: input, shape index: {}]
  %s5 = inlined_call_operand.hbm [shape: f32[16,128], index: 5, kind: output, shape index: {}]
  %s6 = sld [smem:[#allocation0]]
  $region65: #{tpu_custom_call.1} parent=0
    _
  %s8 = ssub.s32 1, %s6
  %s9 = scalar_select 0, %s8, %s6
  $region1: #{tpu_custom_call.1} parent=0
    #allocation2 [shape = 'u8[4096]{0}', space=vmem, size = 0x1000, scoped, tag = 'input window, operand 0']
    #allocation3 [shape = 's32[2]{0}', space=sflag, size = 0x8, scoped, tag = 'scoped memory for tpu_custom_call.1']
    #allocation4 [shape = 's32[2]{0}', space=sflag, size = 0x8, scoped, tag = 'scoped memory for tpu_custom_call.1']
    #allocation5 [shape = 'u8[8192]{0}', space=vmem, size = 0x2000, scoped, tag = 'input window, operand 1, single buffered']
    #allocation6 [shape = 's32[1]{0}', space=sflag, size = 0x4, scoped, tag = 'scoped memory for tpu_custom_call.1']
    #allocation7 [shape = 'u8[8192]{0}', space=vmem, size = 0x2000, scoped, tag = 'input window, operand 3, single buffered']
    #allocation8 [shape = 'u8[8192]{0}', space=vmem, size = 0x2000, scoped, tag = 'output window, operand 0']
    %10 = vsyncpa [#allocation3], 0
    %s11 = scalar_lea.sflag [#allocation3], 1
    %12 = vsyncpa %s11, 0
    %13 = vsyncpa [#allocation6], 0
    %14 = vsyncpa [#allocation4], 0
    %s15 = scalar_lea.sflag [#allocation4], 1
    %16 = vsyncpa %s15, 0
    loop: start=0, step=1, limit=4
    $region2: #{tpu_custom_call.1} parent=1 // loop_pre_header
      _
    $region3: #{tpu_custom_call.1} parent=1 // loop_header
      %s18 = sphi 0, %s22
      %p19 = scmp.ge.s32.totalorder %s18, 4
      %s28 = sphi 0, %s30
      %s31 = sphi 0, %s28
      %s32 = sphi 0, %s31
      %s48 = sphi 0, %s32
      %s52 = sphi 0, %s52
      %s54 = sphi 0, %s52
      %s55 = sphi 0, %s54
      %s69 = sphi 0, %s55
      %s73 = sphi 0, %s73
      %s75 = sphi 0, %s73
      %s76 = sphi 0, %s75
      %s90 = sphi 0, %s76
      %s94 = sphi 0, %s94
      %s96 = sphi 0, %s94
      %s97 = sphi 0, %s96
      %s111 = sphi 0, %s97
      %s115 = sphi 0, %s115
      %s117 = sphi 0, %s115
      %s118 = sphi 0, %s117
      %s132 = sphi 0, %s118
      %s138 = sphi 0, %s140
      %s141 = sphi 0, %s138
      %s142 = sphi 0, %s141
      %s158 = sphi 0, %s142
    $region4: #{tpu_custom_call.1} parent=1 // loop_header_branch
      %21 = sbr.rel (%p19) target = $region8
    $region5: #{tpu_custom_call.1} parent=1 // loop_body
      %s23 = ssub.s32 %s18, 1
      %s24 = ssub.s32 %s18, 2
      %s25 = sadd.s32 %s18, 1
      %s26 = ssub.s32 %s18, %s25
      %p27 = scmp.eq.s32.totalorder %s26, 0
      %s29 = sadd.s32 %s28, 1
      %s30 = scalar_select %p27, %s28, %s29
      %p33 = pneg %p27
      %p34 = scmp.eq.s32.totalorder %s18, 1
      %p35 = por %p33, %p34
      %p36 = scmp.ne.s32.totalorder %s28, %s31
      %p37 = scmp.eq.s32.totalorder %s18, 0
      %p38 = por %p36, %p37
      %p39 = scmp.ne.s32.totalorder %s28, %s31
      %p40 = scmp.eq.s32.totalorder %s23, 1
      %p41 = por %p39, %p40
      %p42 = scmp.ne.s32.totalorder %s31, %s32
      %p43 = scmp.eq.s32.totalorder %s23, 0
      %p44 = por %p42, %p43
      %p45 = scmp.ne.s32.totalorder %s31, %s32
      %p46 = scmp.eq.s32.totalorder %s24, 1
      %p47 = por %p45, %p46
      %p49 = scmp.ne.s32.totalorder %s32, %s48
      %p50 = scmp.eq.s32.totalorder %s24, 0
      %p51 = por %p49, %p50
      %s53 = sadd.s32 %s52, 1
      %p56 = scmp.eq.s32.totalorder %s18, 1
      %p57 = scmp.ne.s32.totalorder %s52, %s54
      %p58 = scmp.eq.s32.totalorder %s18, 0
      %p59 = por %p57, %p58
      %p60 = scmp.ne.s32.totalorder %s52, %s54
      %p61 = scmp.eq.s32.totalorder %s23, 1
      %p62 = por %p60, %p61
      %p63 = scmp.ne.s32.totalorder %s54, %s55
      %p64 = scmp.eq.s32.totalorder %s23, 0
      %p65 = por %p63, %p64
      %p66 = scmp.ne.s32.totalorder %s54, %s55
      %p67 = scmp.eq.s32.totalorder %s24, 1
      %p68 = por %p66, %p67
      %p70 = scmp.ne.s32.totalorder %s55, %s69
      %p71 = scmp.eq.s32.totalorder %s24, 0
      %p72 = por %p70, %p71
      %s74 = sadd.s32 %s73, 1
      %p77 = scmp.eq.s32.totalorder %s18, 1
      %p78 = scmp.ne.s32.totalorder %s73, %s75
      %p79 = scmp.eq.s32.totalorder %s18, 0
      %p80 = por %p78, %p79
      %p81 = scmp.ne.s32.totalorder %s73, %s75
      %p82 = scmp.eq.s32.totalorder %s23, 1
      %p83 = por %p81, %p82
      %p84 = scmp.ne.s32.totalorder %s75, %s76
      %p85 = scmp.eq.s32.totalorder %s23, 0
      %p86 = por %p84, %p85
      %p87 = scmp.ne.s32.totalorder %s75, %s76
      %p88 = scmp.eq.s32.totalorder %s24, 1
      %p89 = por %p87, %p88
      %p91 = scmp.ne.s32.totalorder %s76, %s90
      %p92 = scmp.eq.s32.totalorder %s24, 0
      %p93 = por %p91, %p92
      %s95 = sadd.s32 %s94, 1
      %p98 = scmp.eq.s32.totalorder %s18, 1
      %p99 = scmp.ne.s32.totalorder %s94, %s96
      %p100 = scmp.eq.s32.totalorder %s18, 0
      %p101 = por %p99, %p100
      %p102 = scmp.ne.s32.totalorder %s94, %s96
      %p103 = scmp.eq.s32.totalorder %s23, 1
      %p104 = por %p102, %p103
      %p105 = scmp.ne.s32.totalorder %s96, %s97
      %p106 = scmp.eq.s32.totalorder %s23, 0
      %p107 = por %p105, %p106
      %p108 = scmp.ne.s32.totalorder %s96, %s97
      %p109 = scmp.eq.s32.totalorder %s24, 1
      %p110 = por %p108, %p109
      %p112 = scmp.ne.s32.totalorder %s97, %s111
      %p113 = scmp.eq.s32.totalorder %s24, 0
      %p114 = por %p112, %p113
      %s116 = sadd.s32 %s115, 1
      %p119 = scmp.eq.s32.totalorder %s18, 1
      %p120 = scmp.ne.s32.totalorder %s115, %s117
      %p121 = scmp.eq.s32.totalorder %s18, 0
      %p122 = por %p120, %p121
      %p123 = scmp.ne.s32.totalorder %s115, %s117
      %p124 = scmp.eq.s32.totalorder %s23, 1
      %p125 = por %p123, %p124
      %p126 = scmp.ne.s32.totalorder %s117, %s118
      %p127 = scmp.eq.s32.totalorder %s23, 0
      %p128 = por %p126, %p127
      %p129 = scmp.ne.s32.totalorder %s117, %s118
      %p130 = scmp.eq.s32.totalorder %s24, 1
      %p131 = por %p129, %p130
      %p133 = scmp.ne.s32.totalorder %s118, %s132
      %p134 = scmp.eq.s32.totalorder %s24, 0
      %p135 = por %p133, %p134
      %s136 = ssub.s32 %s18, %s25
      %p137 = scmp.eq.s32.totalorder %s136, 0
      %s139 = sadd.s32 %s138, 1
      %s140 = scalar_select %p137, %s138, %s139
      %p143 = pneg %p137
      %p144 = scmp.eq.s32.totalorder %s18, 1
      %p145 = por %p143, %p144
      %p146 = scmp.ne.s32.totalorder %s138, %s141
      %p147 = scmp.eq.s32.totalorder %s18, 0
      %p148 = por %p146, %p147
      %p149 = scmp.ne.s32.totalorder %s138, %s141
      %p150 = scmp.eq.s32.totalorder %s23, 1
      %p151 = por %p149, %p150
      %p152 = scmp.ne.s32.totalorder %s141, %s142
      %p153 = scmp.eq.s32.totalorder %s23, 0
      %p154 = por %p152, %p153
      %p155 = scmp.ne.s32.totalorder %s141, %s142
      %p156 = scmp.eq.s32.totalorder %s24, 1
      %p157 = por %p155, %p156
      %p159 = scmp.ne.s32.totalorder %s142, %s158
      %p160 = scmp.eq.s32.totalorder %s24, 0
      %p161 = por %p159, %p160
      %p162 = scmp.le.s32.totalorder 1, %s18
      %p163 = scmp.lt.s32.totalorder %s18, 3
      %p164 = pnand %p162, %p163
      %p165 = pneg %p164
      // Predicated region
      $region9: #{tpu_custom_call.1} parent=5 // pred_check
        _
      $region10: #{tpu_custom_call.1} parent=5 // pred_check_branch
        %167 = sbr.rel (%p164) target = $region12
      $region11: #{tpu_custom_call.1} parent=5 // pred_region
        %s168 = ssub.s32 %s18, 1
        // Predicated region
        $region13: #{tpu_custom_call.1} parent=11 // pred_check
          %p169 = pneg %p65
        $region14: #{tpu_custom_call.1} parent=11 // pred_check_branch
          %171 = sbr.rel (%p169) target = $region16
        $region15: #{tpu_custom_call.1} parent=11 // pred_region
          %s173 = ssub.s32 256, 256
          %174 = vsyncadd [#allocation6], %s173
          %s175 = sshll.u32 [#allocation5], 4
          %s176 = int_to_ptr.vmem [resolvable:$true] %s175
          %181 = dma.hbm_to_vmem [thread:$0]  %s1, 256, %s176, [#allocation6], 64, 64, 4
        $region16: #{tpu_custom_call.1} parent=11 // pred_fallthru
          _
        // Predicated region
        $region17: #{tpu_custom_call.1} parent=11 // pred_check
          %p182 = pneg %p86
        $region18: #{tpu_custom_call.1} parent=11 // pred_check_branch
          %184 = sbr.rel (%p182) target = $region20
        $region19: #{tpu_custom_call.1} parent=11 // pred_region
          _
        $region20: #{tpu_custom_call.1} parent=11 // pred_fallthru
          _
        // Predicated region
        $region21: #{tpu_custom_call.1} parent=11 // pred_check
          %p185 = pneg %p107
        $region22: #{tpu_custom_call.1} parent=11 // pred_check_branch
          %187 = sbr.rel (%p185) target = $region24
        $region23: #{tpu_custom_call.1} parent=11 // pred_region
          %s189 = ssub.s32 256, 256
          %190 = vsyncadd [#allocation6], %s189
          %s191 = sshll.u32 [#allocation7], 4
          %s192 = int_to_ptr.vmem [resolvable:$true] %s191
          %197 = dma.hbm_to_vmem [thread:$0]  %s3, 256, %s192, [#allocation6], 64, 64, 4
        $region24: #{tpu_custom_call.1} parent=11 // pred_fallthru
          _
        // Predicated region
        $region25: #{tpu_custom_call.1} parent=11 // pred_check
          %p198 = pneg %p128
        $region26: #{tpu_custom_call.1} parent=11 // pred_check_branch
          %200 = sbr.rel (%p198) target = $region28
        $region27: #{tpu_custom_call.1} parent=11 // pred_region
          _
        $region28: #{tpu_custom_call.1} parent=11 // pred_fallthru
          _
      $region12: #{tpu_custom_call.1} parent=5 // pred_fallthru
        _
      %p201 = scmp.lt.s32.totalorder %s18, 2
      // Predicated region
      $region29: #{tpu_custom_call.1} parent=5 // pred_check
        %p202 = pneg %p201
      $region30: #{tpu_custom_call.1} parent=5 // pred_check_branch
        %204 = sbr.rel (%p202) target = $region32
      $region31: #{tpu_custom_call.1} parent=5 // pred_region
        // Predicated region
        $region33: #{tpu_custom_call.1} parent=31 // pred_check
          %p205 = pneg %p38
        $region34: #{tpu_custom_call.1} parent=31 // pred_check_branch
          %207 = sbr.rel (%p205) target = $region36
        $region35: #{tpu_custom_call.1} parent=31 // pred_region
          %s208 = sand.u32 %s28, 1
          %s209 = scalar_lea.sflag [#allocation3], %s208
          %s210 = sand.u32 %s28, 1
          %s211 = smul.addr %s210, 4
          %s212 = scalar_lea.vmem [#allocation2], %s211
          %s214 = ssub.s32 64, 64
          %215 = vsyncadd %s209, %s214
          %s216 = smul.addr %s18, 64
          %s217 = scalar_lea.hbm %s0, %s216
          %s219 = sshll.u32 %s212, 4
          %s220 = int_to_ptr.vmem [resolvable:$true] %s219
          %222 = dma.hbm_to_vmem [thread:$0]  %s217, 64, %s220, %s209
        $region36: #{tpu_custom_call.1} parent=31 // pred_fallthru
          _
      $region32: #{tpu_custom_call.1} parent=5 // pred_fallthru
        _
      %p223 = scmp.le.s32.totalorder 1, %s18
      %p224 = scmp.lt.s32.totalorder %s18, 3
      %p225 = pnand %p223, %p224
      %p226 = pneg %p225
      // Predicated region
      $region37: #{tpu_custom_call.1} parent=5 // pred_check
        _
      $region38: #{tpu_custom_call.1} parent=5 // pred_check_branch
        %228 = sbr.rel (%p225) target = $region40
      $region39: #{tpu_custom_call.1} parent=5 // pred_region
        %s229 = ssub.s32 %s18, 1
        %s230 = sand.u32 %s31, 1
        %s231 = scalar_lea.sflag [#allocation3], %s230
        %s232 = sand.u32 %s31, 1
        %s233 = smul.addr %s232, 4
        %s234 = scalar_lea.vmem [#allocation2], %s233
        // Predicated region
        $region41: #{tpu_custom_call.1} parent=39 // pred_check
          %p235 = pneg %p44
        $region42: #{tpu_custom_call.1} parent=39 // pred_check_branch
          %237 = sbr.rel (%p235) target = $region44
        $region43: #{tpu_custom_call.1} parent=39 // pred_region
          %238 = dma.done %s231, 64
        $region44: #{tpu_custom_call.1} parent=39 // pred_fallthru
          _
        // Predicated region
        $region45: #{tpu_custom_call.1} parent=39 // pred_check
          %p239 = pneg %p65
        $region46: #{tpu_custom_call.1} parent=39 // pred_check_branch
          %241 = sbr.rel (%p239) target = $region48
        $region47: #{tpu_custom_call.1} parent=39 // pred_region
          %242 = dma.done [#allocation6], 256
        $region48: #{tpu_custom_call.1} parent=39 // pred_fallthru
          _
        // Predicated region
        $region49: #{tpu_custom_call.1} parent=39 // pred_check
          %p243 = pneg %p107
        $region50: #{tpu_custom_call.1} parent=39 // pred_check_branch
          %245 = sbr.rel (%p243) target = $region52
        $region51: #{tpu_custom_call.1} parent=39 // pred_region
          %246 = dma.done [#allocation6], 256
        $region52: #{tpu_custom_call.1} parent=39 // pred_fallthru
          _
        %s247 = sand.u32 %s31, 1
        %s248 = scalar_lea.sflag [#allocation3], %s247
        %s249 = sand.u32 %s31, 1
        %s250 = smul.addr %s249, 4
        %s251 = scalar_lea.vmem [#allocation2], %s250
        %p252 = pneg %p44
        %p253 = pneg %p41
        %p254 = pneg %p65
        %p255 = pneg %p62
        %p256 = pneg %p86
        %p257 = pneg %p83
        %p258 = pneg %p107
        %p259 = pneg %p104
        %p260 = pneg %p128
        %p261 = pneg %p125
        %p262 = pneg %p154
        %p263 = pneg %p151
        %s264 = sand.u32 %s141, 1
        %s265 = scalar_lea.sflag [#allocation4], %s264
        %s266 = sand.u32 %s141, 1
        %s267 = smul.addr %s266, 8
        %s268 = scalar_lea.vmem [#allocation8], %s267
        %v270 = vld [vmem:[%s234] sm:$0xf]
        %v271 = vld [vmem:[#allocation5] sm:$0xf]
        %v272 = vld [vmem:[#allocation5 + $0x4] sm:$0xf]
        %v273 = vld [vmem:[#allocation5 + $0x8] sm:$0xf]
        %v274 = vld [vmem:[#allocation5 + $0xc] sm:$0xf]
        %v275 = vld [vmem:[%s2] sm:$0x1]
        %v277 = vlaneseq
        %v278 = vshrl.u32 %v277, 7
        %v279 = vsub.s32 0, %v278
        %v280 = vrot.slane %v275, %v279
        %v286 = vunpack.c.l.b16 %v271
        %v287 = vunpack.c.l.b16 %v272
        %v288 = vunpack.c.l.b16 %v273
        %v289 = vunpack.c.l.b16 %v274
        %v290 = vpack.c.b16 %v287, %v286
        %v291 = vpack.c.b16 %v289, %v288
        %vm294 = vcmask 261120
        %v296 = vsel %vm294, %v270, 0
        %298 = vmatprep.subr.bf16.mxu0 0
        %299 = vmatpush1.bf16.msra.mxu0 %v290
        %300 = vmatprep.subr.bf16.mxu0 0
        %301 = vmatpush1.bf16.msra.mxu0 %v291
        %302 = vmatprep.subr.bf16.mxu0 0
        %303 = vmatpush1.bf16.msra.mxu0 0
        %304 = vmatprep.subr.bf16.mxu0 0
        %305 = vmatpush1.bf16.msra.mxu0 0
        %306 = vmatprep.subr.bf16.mxu0 0
        %307 = vmatpush1.bf16.msra.mxu0 0
        %308 = vmatprep.subr.bf16.mxu0 0
        %309 = vmatpush1.bf16.msra.mxu0 0
        %310 = vmatprep.subr.bf16.mxu0 0
        %311 = vmatpush1.bf16.msra.mxu0 0
        %312 = vmatprep.subr.bf16.mxu0 0
        %313 = vmatpush1.bf16.msra.mxu0 0
        %314 = vmatprep.subr.bf16.mxu0 0
        %315 = vmatpush1.bf16.msra.mxu0 0
        %316 = vmatprep.subr.bf16.mxu0 0
        %317 = vmatpush1.bf16.msra.mxu0 0
        %318 = vmatprep.subr.bf16.mxu0 0
        %319 = vmatpush1.bf16.msra.mxu0 0
        %320 = vmatprep.subr.bf16.mxu0 0
        %321 = vmatpush1.bf16.msra.mxu0 0
        %322 = vmatprep.subr.bf16.mxu0 0
        %323 = vmatpush1.bf16.msra.mxu0 0
        %324 = vmatprep.subr.bf16.mxu0 0
        %325 = vmatpush1.bf16.msra.mxu0 0
        %326 = vmatprep.subr.bf16.mxu0 0
        %327 = vmatpush1.bf16.msra.mxu0 0
        %328 = vmatprep.subr.bf16.mxu0 0
        %329 = vmatpush1.bf16.msra.mxu0 0
        %330 = vmatprep.mubr.bf16.mxu0 0
        %331 = vmatmul.mubr.bf16.gmra.mrb[0].mxu0 %v296
        %v332 = vpop.f32.mrb[0].mxu0
        %v333 = vadd.f32 %v280, %v332
        %v334 = vpop.f32.mrb[0].mxu0
        %v335 = vpop.f32.mrb[0].mxu0
        %v336 = vpop.f32.mrb[0].mxu0
        %337 = vdwg.mxu0
        %v338 = vtanh.pop %v333
        %v339 = vpack.c.bf16 %v338, %v338
        %v340 = vld [vmem:[#allocation7] sm:$0xf]
        %v341 = vld [vmem:[#allocation7 + $0x4] sm:$0xf]
        %v342 = vld [vmem:[#allocation7 + $0x8] sm:$0xf]
        %v343 = vld [vmem:[#allocation7 + $0xc] sm:$0xf]
        %v344 = vld [vmem:[%s4] sm:$0x1]
        %v346 = vlaneseq
        %v347 = vshrl.u32 %v346, 7
        %v348 = vsub.s32 0, %v347
        %v349 = vrot.slane %v344, %v348
        %v355 = vunpack.c.l.b16 %v340
        %v356 = vunpack.c.l.b16 %v341
        %v357 = vunpack.c.l.b16 %v342
        %v358 = vunpack.c.l.b16 %v343
        %v359 = vpack.c.b16 %v356, %v355
        %v360 = vpack.c.b16 %v358, %v357
        %v364 = vsel %vm294, %v339, 0
        %366 = vmatprep.subr.bf16.mxu0 0
        %367 = vmatpush1.bf16.msra.mxu0 %v359
        %368 = vmatprep.subr.bf16.mxu0 0
        %369 = vmatpush1.bf16.msra.mxu0 %v360
        %370 = vmatprep.subr.bf16.mxu0 0
        %371 = vmatpush1.bf16.msra.mxu0 0
        %372 = vmatprep.subr.bf16.mxu0 0
        %373 = vmatpush1.bf16.msra.mxu0 0
        %374 = vmatprep.subr.bf16.mxu0 0
        %375 = vmatpush1.bf16.msra.mxu0 0
        %376 = vmatprep.subr.bf16.mxu0 0
        %377 = vmatpush1.bf16.msra.mxu0 0
        %378 = vmatprep.subr.bf16.mxu0 0
        %379 = vmatpush1.bf16.msra.mxu0 0
        %380 = vmatprep.subr.bf16.mxu0 0
        %381 = vmatpush1.bf16.msra.mxu0 0
        %382 = vmatprep.subr.bf16.mxu0 0
        %383 = vmatpush1.bf16.msra.mxu0 0
        %384 = vmatprep.subr.bf16.mxu0 0
        %385 = vmatpush1.bf16.msra.mxu0 0
        %386 = vmatprep.subr.bf16.mxu0 0
        %387 = vmatpush1.bf16.msra.mxu0 0
        %388 = vmatprep.subr.bf16.mxu0 0
        %389 = vmatpush1.bf16.msra.mxu0 0
        %390 = vmatprep.subr.bf16.mxu0 0
        %391 = vmatpush1.bf16.msra.mxu0 0
        %392 = vmatprep.subr.bf16.mxu0 0
        %393 = vmatpush1.bf16.msra.mxu0 0
        %394 = vmatprep.subr.bf16.mxu0 0
        %395 = vmatpush1.bf16.msra.mxu0 0
        %396 = vmatprep.subr.bf16.mxu0 0
        %397 = vmatpush1.bf16.msra.mxu0 0
        %398 = vmatprep.mubr.bf16.mxu0 0
        %399 = vmatmul.mubr.bf16.gmra.mrb[0].mxu0 %v364
        %v400 = vpop.f32.mrb[0].mxu0
        %v401 = vadd.f32 %v349, %v400
        %v402 = vpop.f32.mrb[0].mxu0
        %v403 = vpop.f32.mrb[0].mxu0
        %v404 = vpop.f32.mrb[0].mxu0
        %405 = vdwg.mxu0
        %406 = vst [vmem:[%s268] sm:$0xff] %v401
        %s407 = sand.u32 %s141, 1
        %s408 = scalar_lea.sflag [#allocation4], %s407
        %s409 = sand.u32 %s141, 1
        %s410 = smul.addr %s409, 8
        %s411 = scalar_lea.vmem [#allocation8], %s410
        // Predicated region
        $region53: #{tpu_custom_call.1} parent=39 // pred_check
          %p412 = pneg %p151
        $region54: #{tpu_custom_call.1} parent=39 // pred_check_branch
          %414 = sbr.rel (%p412) target = $region56
        $region55: #{tpu_custom_call.1} parent=39 // pred_region
          %s416 = ssub.s32 128, 128
          %417 = vsyncadd %s408, %s416
          %s418 = smul.addr %s23, 128
          %s419 = scalar_lea.hbm %s5, %s418
          %s421 = sshll.u32 %s411, 4
          %s422 = int_to_ptr.vmem [resolvable:$true] %s421
          %424 = dma.vmem_to_hbm [thread:$0]  %s422, 128, %s419, %s408
        $region56: #{tpu_custom_call.1} parent=39 // pred_fallthru
          _
      $region40: #{tpu_custom_call.1} parent=5 // pred_fallthru
        _
      %p425 = scmp.le.s32.totalorder 2, %s18
      // Predicated region
      $region57: #{tpu_custom_call.1} parent=5 // pred_check
        %p426 = pneg %p425
      $region58: #{tpu_custom_call.1} parent=5 // pred_check_branch
        %428 = sbr.rel (%p426) target = $region60
      $region59: #{tpu_custom_call.1} parent=5 // pred_region
        %s429 = ssub.s32 %s18, 2
        // Predicated region
        $region61: #{tpu_custom_call.1} parent=59 // pred_check
          %p430 = pneg %p157
        $region62: #{tpu_custom_call.1} parent=59 // pred_check_branch
          %432 = sbr.rel (%p430) target = $region64
        $region63: #{tpu_custom_call.1} parent=59 // pred_region
          %s433 = sand.u32 %s142, 1
          %s434 = scalar_lea.sflag [#allocation4], %s433
          %s435 = sand.u32 %s142, 1
          %s436 = smul.addr %s435, 8
          %s437 = scalar_lea.vmem [#allocation8], %s436
          %438 = dma.done %s434, 128
        $region64: #{tpu_custom_call.1} parent=59 // pred_fallthru
          _
      $region60: #{tpu_custom_call.1} parent=5 // pred_fallthru
        _
    $region6: #{tpu_custom_call.1} parent=1 // loop_footer
      %s22 = sadd.s32 1, %s18
    $region7: #{tpu_custom_call.1} parent=1 // loop_footer_branch
      %17 = sbr.rel target = $region3
    $region8: #{tpu_custom_call.1} parent=1 // loop_exit
      _
    %439 = vsyncpa [#allocation3], 1
    %s440 = scalar_lea.sflag [#allocation3], 1
    %441 = vsyncpa %s440, 1
    %442 = vsyncpa [#allocation6], 1
    %443 = vsyncpa [#allocation4], 1
    %s444 = scalar_lea.sflag [#allocation4], 1
    %445 = vsyncpa %s444, 1

</llo_original>
